<compile_context>
chip_gen: v6e
topology: v6e:2x2x1
jax: 0.10.0
libtpu: 0.0.40
codegen_flags: <defaults>
</compile_context>

<pallas_src>
import functools
import string

import jax
import jax.numpy as jnp
from jax.experimental import pallas as pl
from jax.experimental.pallas import tpu as pltpu

# ---- module constants (from the reference script) ----
all_letters = string.ascii_letters + ".,;"
n_letters = len(all_letters)   # 55
n_hidden = 128
n_categories = 18              # name-origin categories in the tutorial

# lane/sublane-friendly padded sizes used by the kernel
L_PAD = 128                    # n_letters 55 -> 128 (gather-table rows)
C_PAD = 128                    # n_categories 18 -> 128 (output lanes)
T_BUCKET = 32                  # static length bucket: any name <= 32 letters, one compile
OUT_ROWS = 8                   # merged output slab: row 0 = log-probs, row 1 = h_T

assert n_hidden == C_PAD, "output slab layout assumes H == C_PAD == 128"


def letter_to_index(letter):
    return all_letters.find(letter)


def line_to_tensor(line):
    # (seq_len, 1, n_letters) one-hot, same as the PyTorch lineToTensor (reference only)
    t = jnp.zeros((len(line), 1, n_letters), dtype=jnp.float32)
    for li, letter in enumerate(line):
        t = t.at[li, 0, letter_to_index(letter)].set(1.0)
    return t


def encode_line(line, bucket=T_BUCKET):
    """Letter indices padded to the static bucket + true length (what the kernel eats)."""
    idx = [letter_to_index(c) for c in line]
    idx = idx + [0] * (bucket - len(idx))
    return (jnp.array(idx, dtype=jnp.int32),
            jnp.array([len(line)], dtype=jnp.int32))


# ------------------------- Pallas kernel -------------------------
def rnn_seq_kernel(len_ref, idx_ref, wxb_h_ref, wxb_o_ref, wh_hh_ref, wh_ho_ref,
                   out_ref, *, n_classes):
    """Fused RNN over the whole sequence (batch 1).

    len_ref   : SMEM (1,)  int32     true sequence length T (1 <= T <= T_BUCKET)
    idx_ref   : SMEM (T_BUCKET,) i32 letter indices, zero padded
    wxb_h_ref : VMEM (L_PAD, H)      rows = W_i2h_x[:, letter] + b_i2h  (bias folded)
    wxb_o_ref : VMEM (L_PAD, C_PAD)  rows = W_i2o_x[:, letter] + b_i2o  (bias folded)
    wh_hh_ref : VMEM (H, H)          hidden -> hidden recurrence weight
    wh_ho_ref : VMEM (H, C_PAD)      hidden -> output weight (used once)
    out_ref   : VMEM (8, C_PAD)      row 0 = log_softmax(last logits), row 1 = h_T
    """
    H = wh_hh_ref.shape[0]
    T = len_ref[0]
    wh_hh = wh_hh_ref[...]                              # resident for the whole loop

    # (1) Recurrence over steps 0 .. T-2 carrying only h (1, H) in vregs.
    #     h_{t+1} = (W_x_h[idx_t] + b_h) + h_t @ Wh_hh      (bias pre-folded in the table)
    def step(t, h):
        xb = wxb_h_ref[pl.ds(idx_ref[t], 1), :]         # (1, H) row gather from VMEM
        return xb + jnp.dot(h, wh_hh, preferred_element_type=jnp.float32)

    h0 = jnp.zeros((1, H), jnp.float32)
    h_last = jax.lax.fori_loop(0, T - 1, step, h0)      # = h_{T-1}

    # (2) Final step: both outputs come from combined_{T-1} = [x_{T-1}, h_{T-1}].
    idx_last = idx_ref[T - 1]
    h_T = (wxb_h_ref[pl.ds(idx_last, 1), :]
           + jnp.dot(h_last, wh_hh, preferred_element_type=jnp.float32))
    logits = (wxb_o_ref[pl.ds(idx_last, 1), :]
              + jnp.dot(h_last, wh_ho_ref[...], preferred_element_type=jnp.float32))

    # (3) Classification head once: mask padded category lanes, log_softmax.
    lane = jax.lax.broadcasted_iota(jnp.int32, logits.shape, 1)
    masked = jnp.where(lane < n_classes, logits, -1e30)  # padded lanes can't win
    m = jnp.max(masked, axis=1, keepdims=True)
    shifted = masked - m
    lse = jnp.log(jnp.sum(jnp.exp(shifted), axis=1, keepdims=True))
    logp = shifted - lse                                  # (1, C_PAD)

    # (4) Single lane-dense, sublane-padded output slab.
    pad_rows = jnp.zeros((OUT_ROWS - 2, out_ref.shape[1]), jnp.float32)
    out_ref[...] = jnp.concatenate([logp, h_T, pad_rows], axis=0)


# ------------------------- wrapper -------------------------
def rnn_forward_sequence(letter_idx, seq_len, params, *, n_classes):
    """letter_idx: (T_BUCKET,) int32, seq_len: (1,) int32.
       Returns (log_probs (1, n_classes), hidden_T (1, H))."""
    H = params["wh_hh"].shape[0]
    kernel = functools.partial(rnn_seq_kernel, n_classes=n_classes)

    smem_spec = pl.BlockSpec(memory_space=pltpu.SMEM)
    vmem_spec = pl.BlockSpec(memory_space=pltpu.VMEM)

    out = pl.pallas_call(
        kernel,
        out_shape=jax.ShapeDtypeStruct((OUT_ROWS, C_PAD), jnp.float32),
        in_specs=[smem_spec, smem_spec, vmem_spec, vmem_spec, vmem_spec, vmem_spec],
        out_specs=vmem_spec,
    )(seq_len, letter_idx,
      params["wxb_h"], params["wxb_o"], params["wh_hh"], params["wh_ho"])

    log_probs = out[0:1, :n_classes]
    hidden = out[1:2, :H]
    return log_probs, hidden


# ------------------------- parameter setup -------------------------
def init_params(key, input_size, hidden_size, output_size,
                *, input_pad=L_PAD, output_pad=C_PAD):
    """Deterministic init mimicking nn.Linear (uniform +-1/sqrt(fan_in)).
       Returns (kernel_params, ref_params):
         kernel_params: split + bias-folded + padded gather tables / weights
         ref_params   : split, unpadded weights for the pure-JAX reference."""
    k1, k2, k3, k4 = jax.random.split(key, 4)
    fan_in = input_size + hidden_size
    bound = 1.0 / jnp.sqrt(fan_in)

    # PyTorch Linear layout: weight (out, in), bias (out,)
    w_i2h = jax.random.uniform(k1, (hidden_size, fan_in), jnp.float32, -bound, bound)
    b_i2h = jax.random.uniform(k2, (hidden_size,), jnp.float32, -bound, bound)
    w_i2o = jax.random.uniform(k3, (output_size, fan_in), jnp.float32, -bound, bound)
    b_i2o = jax.random.uniform(k4, (output_size,), jnp.float32, -bound, bound)

    ref = {
        "w_ih_x": w_i2h[:, :input_size].T,    # (L, H)
        "w_ih_h": w_i2h[:, input_size:].T,    # (H, H)
        "b_ih":   b_i2h[None, :],             # (1, H)
        "w_io_x": w_i2o[:, :input_size].T,    # (L, C)
        "w_io_h": w_i2o[:, input_size:].T,    # (H, C)
        "b_io":   b_i2o[None, :],             # (1, C)
    }

    # Bias-folded gather tables (exact: x is exactly one-hot, one letter per step).
    wxb_h = jnp.zeros((input_pad, hidden_size), jnp.float32)
    wxb_h = wxb_h.at[:input_size, :].set(ref["w_ih_x"] + ref["b_ih"])

    wxb_o = jnp.zeros((input_pad, output_pad), jnp.float32)
    wxb_o = wxb_o.at[:input_size, :output_size].set(ref["w_io_x"] + ref["b_io"])

    wh_hh = ref["w_ih_h"]                                          # (H, H)

    wh_ho = jnp.zeros((hidden_size, output_pad), jnp.float32)
    wh_ho = wh_ho.at[:, :output_size].set(ref["w_io_h"])

    kern = {"wxb_h": wxb_h, "wxb_o": wxb_o, "wh_hh": wh_hh, "wh_ho": wh_ho}
    return kern, ref


def reference_forward_sequence(x_seq, h0, ref_params):
    """Pure-JAX reference: exactly the PyTorch RNN cell unrolled over the sequence."""
    hp = jax.lax.Precision.HIGHEST
    h = h0
    out = None
    for t in range(x_seq.shape[0]):
        x = x_seq[t:t + 1]
        logits = (jnp.dot(x, ref_params["w_io_x"], precision=hp)
                  + jnp.dot(h, ref_params["w_io_h"], precision=hp)
                  + ref_params["b_io"])
        h = (jnp.dot(x, ref_params["w_ih_x"], precision=hp)
             + jnp.dot(h, ref_params["w_ih_h"], precision=hp)
             + ref_params["b_ih"])
        out = jax.nn.log_softmax(logits, axis=1)
    return out, h


# ------------------------- main -------------------------
if __name__ == "__main__":
    key = jax.random.PRNGKey(0)
    kernel_params, ref_params = init_params(key, n_letters, n_hidden, n_categories)

    fwd = jax.jit(functools.partial(rnn_forward_sequence, n_classes=n_categories))

    # Two names of different lengths run through the SAME compiled kernel
    # (length is a runtime SMEM scalar, not a trace constant).
    for name in ("Albert", "Satoshi"):
        idx, length = encode_line(name)
        log_probs, hidden = fwd(idx, length, kernel_params)
        log_probs = jax.block_until_ready(log_probs)
        hidden = jax.block_until_ready(hidden)

        # sanity check against the pure-JAX reference over the full sequence
        line = line_to_tensor(name)                       # (T, 1, n_letters)
        x_seq = line.reshape(line.shape[0], n_letters)    # (T, n_letters), batch = 1
        ref_out, ref_h = reference_forward_sequence(
            x_seq, jnp.zeros((1, n_hidden), jnp.float32), ref_params)

        assert log_probs.shape == (1, n_categories)
        assert hidden.shape == (1, n_hidden)
        assert jnp.allclose(log_probs, ref_out, atol=1e-4), f"log_softmax mismatch: {name}"
        assert jnp.allclose(hidden, ref_h, atol=1e-4), f"hidden state mismatch: {name}"
        # log-softmax rows sum to 1 in prob space
        assert jnp.allclose(jnp.sum(jnp.exp(log_probs), axis=1), 1.0, atol=1e-5)

    print("KERNEL_OK")
</pallas_src>

<mosaic_0001>
module attributes {stable_mosaic.version = 11 : i64} {
  func.func @rnn_seq_kernel(%arg0: memref<1xi32, #tpu.memory_space<smem>>, %arg1: memref<32xi32, #tpu.memory_space<smem>>, %arg2: memref<128x128xf32, #tpu.memory_space<vmem>>, %arg3: memref<128x128xf32, #tpu.memory_space<vmem>>, %arg4: memref<128x128xf32, #tpu.memory_space<vmem>>, %arg5: memref<128x128xf32, #tpu.memory_space<vmem>>, %arg6: memref<8x128xf32, #tpu.memory_space<vmem>>) attributes {dimension_semantics = [], scalar_prefetch = 0 : i64, scratch_operands = 0 : i64, tpu.core_type = #tpu.core_type<tc>} {
    %c0 = arith.constant 0 : index
    %0 = memref.load %arg0[%c0] : memref<1xi32, #tpu.memory_space<smem>>
    %c0_0 = arith.constant 0 : index
    %c0_1 = arith.constant 0 : index
    %1 = vector.load %arg4[%c0_0, %c0_1] : memref<128x128xf32, #tpu.memory_space<vmem>>, vector<128x128xf32>
    %cst = arith.constant 0.000000e+00 : f32
    %2 = vector.broadcast %cst : f32 to vector<1x128xf32>
    %c1_i32 = arith.constant 1 : i32
    %3 = arith.subi %0, %c1_i32 : i32
    %c0_i32 = arith.constant 0 : i32
    %4 = arith.subi %3, %c0_i32 : i32
    %5 = arith.addi %c0_i32, %4 : i32
    %c1_i32_2 = arith.constant 1 : i32
    %6 = scf.for %arg7 = %c0_i32 to %5 step %c1_i32_2 iter_args(%arg8 = %2) -> (vector<1x128xf32>)  : i32 {
      %37 = arith.index_cast %arg7 : i32 to index
      %38 = memref.load %arg1[%37] : memref<32xi32, #tpu.memory_space<smem>>
      %39 = arith.index_cast %38 : i32 to index
      %c0_16 = arith.constant 0 : index
      %40 = vector.load %arg2[%39, %c0_16] : memref<128x128xf32, #tpu.memory_space<vmem>>, vector<1x128xf32>
      %cst_17 = arith.constant dense<0.000000e+00> : vector<1x128xf32>
      %41 = tpu.matmul %arg8, %1, %cst_17 {dimension_numbers = #tpu.dot_dimension_numbers<[1], [0], [0], [1], [0, 0, 1, 1], [], []>} : vector<1x128xf32>, vector<128x128xf32>, vector<1x128xf32> -> vector<1x128xf32>
      %42 = arith.addf %40, %41 : vector<1x128xf32>
      scf.yield %42 : vector<1x128xf32>
    }
    %c1_i32_3 = arith.constant 1 : i32
    %7 = arith.subi %0, %c1_i32_3 : i32
    %8 = arith.index_cast %7 : i32 to index
    %9 = memref.load %arg1[%8] : memref<32xi32, #tpu.memory_space<smem>>
    %10 = arith.index_cast %9 : i32 to index
    %c0_4 = arith.constant 0 : index
    %11 = vector.load %arg2[%10, %c0_4] : memref<128x128xf32, #tpu.memory_space<vmem>>, vector<1x128xf32>
    %cst_5 = arith.constant dense<0.000000e+00> : vector<1x128xf32>
    %12 = tpu.matmul %6, %1, %cst_5 {dimension_numbers = #tpu.dot_dimension_numbers<[1], [0], [0], [1], [0, 0, 1, 1], [], []>} : vector<1x128xf32>, vector<128x128xf32>, vector<1x128xf32> -> vector<1x128xf32>
    %13 = arith.addf %11, %12 : vector<1x128xf32>
    %14 = arith.index_cast %9 : i32 to index
    %c0_6 = arith.constant 0 : index
    %15 = vector.load %arg3[%14, %c0_6] : memref<128x128xf32, #tpu.memory_space<vmem>>, vector<1x128xf32>
    %c0_7 = arith.constant 0 : index
    %c0_8 = arith.constant 0 : index
    %16 = vector.load %arg5[%c0_7, %c0_8] : memref<128x128xf32, #tpu.memory_space<vmem>>, vector<128x128xf32>
    %cst_9 = arith.constant dense<0.000000e+00> : vector<1x128xf32>
    %17 = tpu.matmul %6, %16, %cst_9 {dimension_numbers = #tpu.dot_dimension_numbers<[1], [0], [0], [1], [0, 0, 1, 1], [], []>} : vector<1x128xf32>, vector<128x128xf32>, vector<1x128xf32> -> vector<1x128xf32>
    %18 = arith.addf %15, %17 : vector<1x128xf32>
    %19 = tpu.iota {dimensions = array<i32: 1>} : vector<1x128xi32>
    %c18_i32 = arith.constant 18 : i32
    %20 = vector.broadcast %c18_i32 : i32 to vector<1x128xi32>
    %21 = arith.cmpi slt, %19, %20 : vector<1x128xi32>
    %cst_10 = arith.constant -1.000000e+30 : f32
    %22 = vector.broadcast %cst_10 : f32 to vector<1x128xf32>
    %23 = arith.select %21, %18, %22 : vector<1x128xi1>, vector<1x128xf32>
    %cst_11 = arith.constant dense<0xFF800000> : vector<1xf32>
    %24 = vector.multi_reduction <maximumf>, %23, %cst_11 [1] : vector<1x128xf32> to vector<1xf32>
    %25 = vector.shape_cast %24 : vector<1xf32> to vector<1x1xf32>
    %26 = vector.broadcast %25 : vector<1x1xf32> to vector<1x128xf32>
    %27 = arith.subf %23, %26 : vector<1x128xf32>
    %28 = math.exp %27 : vector<1x128xf32>
    %cst_12 = arith.constant dense<0.000000e+00> : vector<1xf32>
    %29 = vector.multi_reduction <add>, %28, %cst_12 [1] : vector<1x128xf32> to vector<1xf32>
    %30 = vector.shape_cast %29 : vector<1xf32> to vector<1x1xf32>
    %31 = math.log %30 : vector<1x1xf32>
    %32 = vector.broadcast %31 : vector<1x1xf32> to vector<1x128xf32>
    %33 = arith.subf %27, %32 : vector<1x128xf32>
    %cst_13 = arith.constant 0.000000e+00 : f32
    %34 = vector.broadcast %cst_13 : f32 to vector<6x128xf32>
    %35 = tpu.concatenate %33, %13, %34 in 0 : vector<1x128xf32>, vector<1x128xf32>, vector<6x128xf32> -> vector<8x128xf32>
    %c0_14 = arith.constant 0 : index
    %c0_15 = arith.constant 0 : index
    %36 = vector.load %arg6[%c0_14, %c0_15] : memref<8x128xf32, #tpu.memory_space<vmem>>, vector<8x128xf32>
    tpu.vector_store %arg6[%c0_14, %c0_15], %35 {strides = array<i32>} : memref<8x128xf32, #tpu.memory_space<vmem>>, vector<8x128xf32>,
    return
  }
}

</mosaic_0001>

<llo_original>
// kernel: rnn_forward_sequence.1
$region0: #{rnn_forward_sequence.1}
  #allocation0 [shape = 'u32[]', space=smem, size = 0x4, offset = 0x4, fixed_abs, tag = 'smem constant byte address 0x4 - core index']
  #allocation1 [shape = 'u32[144,128]{1,0:T(1,128)}', space=vmem, size = 0x12000, scoped, tag = 'internal scratch']
  #allocation2 [shape = 's32[1]{0:T(128)S(6)}', space=smem, size = 0x200, scoped, tag = 'scoped memory for rnn_forward_sequence.1']
  %s0 = inlined_call_operand.<no memory space> [shape: s32[1], index: 0, kind: input, shape index: {}]
  %s1 = inlined_call_operand.vmem [shape: s32[32], index: 1, kind: input, shape index: {}]
  %s2 = inlined_call_operand.hbm [shape: f32[128,128], index: 2, kind: input, shape index: {}]
  %s3 = inlined_call_operand.hbm [shape: f32[128,128], index: 3, kind: input, shape index: {}]
  %s4 = inlined_call_operand.hbm [shape: f32[128,128], index: 4, kind: input, shape index: {}]
  %s5 = inlined_call_operand.hbm [shape: f32[128,128], index: 5, kind: input, shape index: {}]
  %s6 = inlined_call_operand.vmem [shape: f32[8,128], index: 6, kind: output, shape index: {}]
  %s7 = sld [smem:[#allocation0]]
  $region61: #{rnn_forward_sequence.1} parent=0
    _
  %s9 = ssub.s32 1, %s7
  %s10 = scalar_select 0, %s9, %s7
  %11 = sst [smem:[#allocation2]] %s0
  $region1: #{rnn_forward_sequence.1} parent=0
    #allocation3 [shape = 'u8[512]{0}', space=smem, size = 0x200, scoped, tag = 'input window, operand 1, single buffered']
    #allocation4 [shape = 's32[1]{0}', space=sflag, size = 0x4, scoped, tag = 'scoped memory for rnn_forward_sequence.1']
    #allocation5 [shape = 's32[1]{0}', space=sflag, size = 0x4, scoped, tag = 'scoped memory for rnn_forward_sequence.1']
    #allocation6 [shape = 'u8[65536]{0}', space=vmem, size = 0x10000, scoped, tag = 'input window, operand 2, single buffered']
    #allocation7 [shape = 'u8[65536]{0}', space=vmem, size = 0x10000, scoped, tag = 'input window, operand 3, single buffered']
    #allocation8 [shape = 's32[1]{0}', space=sflag, size = 0x4, scoped, tag = 'scoped memory for rnn_forward_sequence.1']
    #allocation9 [shape = 'u8[65536]{0}', space=vmem, size = 0x10000, scoped, tag = 'input window, operand 4, single buffered']
    #allocation10 [shape = 'u8[65536]{0}', space=vmem, size = 0x10000, scoped, tag = 'input window, operand 5, single buffered']
    #allocation11 [shape = 's32[1]{0}', space=sflag, size = 0x4, scoped, tag = 'scoped memory for rnn_forward_sequence.1']
    %12 = vsyncpa [#allocation5], 0
    %13 = vsyncpa [#allocation4], 0
    %14 = vsyncpa [#allocation8], 0
    %15 = vsyncpa [#allocation11], 0
    // Predicated region
    $region2: #{rnn_forward_sequence.1} parent=1 // pred_check
      _
    $region3: #{rnn_forward_sequence.1} parent=1 // pred_check_branch
      %17 = sbr.rel (0) target = $region5
    $region4: #{rnn_forward_sequence.1} parent=1 // pred_region
      _
    $region5: #{rnn_forward_sequence.1} parent=1 // pred_fallthru
      _
    // Predicated region
    $region6: #{rnn_forward_sequence.1} parent=1 // pred_check
      _
    $region7: #{rnn_forward_sequence.1} parent=1 // pred_check_branch
      %19 = sbr.rel (0) target = $region9
    $region8: #{rnn_forward_sequence.1} parent=1 // pred_region
      %s21 = ssub.s32 16, 16
      %22 = vsyncadd [#allocation5], %s21
      %s24 = sshll.u32 %s1, 4
      %s25 = int_to_ptr.vmem [resolvable:$true] %s24
      %27 = dma.vmem_to_smem %s25, 16, [#allocation3], [#allocation5]
    $region9: #{rnn_forward_sequence.1} parent=1 // pred_fallthru
      _
    // Predicated region
    $region10: #{rnn_forward_sequence.1} parent=1 // pred_check
      _
    $region11: #{rnn_forward_sequence.1} parent=1 // pred_check_branch
      %29 = sbr.rel (0) target = $region13
    $region12: #{rnn_forward_sequence.1} parent=1 // pred_region
      %s31 = ssub.s32 2048, 2048
      %32 = vsyncadd [#allocation4], %s31
      %s33 = sshll.u32 [#allocation6], 4
      %s34 = int_to_ptr.vmem [resolvable:$true] %s33
      %39 = dma.hbm_to_vmem [thread:$0]  %s2, 2048, %s34, [#allocation4], 128, 128, 8
    $region13: #{rnn_forward_sequence.1} parent=1 // pred_fallthru
      _
    // Predicated region
    $region14: #{rnn_forward_sequence.1} parent=1 // pred_check
      _
    $region15: #{rnn_forward_sequence.1} parent=1 // pred_check_branch
      %41 = sbr.rel (0) target = $region17
    $region16: #{rnn_forward_sequence.1} parent=1 // pred_region
      %s43 = ssub.s32 2048, 2048
      %44 = vsyncadd [#allocation8], %s43
      %s45 = sshll.u32 [#allocation7], 4
      %s46 = int_to_ptr.vmem [resolvable:$true] %s45
      %51 = dma.hbm_to_vmem [thread:$0]  %s3, 2048, %s46, [#allocation8], 128, 128, 8
    $region17: #{rnn_forward_sequence.1} parent=1 // pred_fallthru
      _
    // Predicated region
    $region18: #{rnn_forward_sequence.1} parent=1 // pred_check
      _
    $region19: #{rnn_forward_sequence.1} parent=1 // pred_check_branch
      %53 = sbr.rel (0) target = $region21
    $region20: #{rnn_forward_sequence.1} parent=1 // pred_region
      %s55 = ssub.s32 2048, 2048
      %56 = vsyncadd [#allocation8], %s55
      %s57 = sshll.u32 [#allocation9], 4
      %s58 = int_to_ptr.vmem [resolvable:$true] %s57
      %63 = dma.hbm_to_vmem [thread:$0]  %s4, 2048, %s58, [#allocation8], 128, 128, 8
    $region21: #{rnn_forward_sequence.1} parent=1 // pred_fallthru
      _
    // Predicated region
    $region22: #{rnn_forward_sequence.1} parent=1 // pred_check
      _
    $region23: #{rnn_forward_sequence.1} parent=1 // pred_check_branch
      %65 = sbr.rel (0) target = $region25
    $region24: #{rnn_forward_sequence.1} parent=1 // pred_region
      %s67 = ssub.s32 2048, 2048
      %68 = vsyncadd [#allocation11], %s67
      %s69 = sshll.u32 [#allocation10], 4
      %s70 = int_to_ptr.vmem [resolvable:$true] %s69
      %75 = dma.hbm_to_vmem [thread:$0]  %s5, 2048, %s70, [#allocation11], 128, 128, 8
    $region25: #{rnn_forward_sequence.1} parent=1 // pred_fallthru
      _
    // Predicated region
    $region26: #{rnn_forward_sequence.1} parent=1 // pred_check
      _
    $region27: #{rnn_forward_sequence.1} parent=1 // pred_check_branch
      %77 = sbr.rel (0) target = $region29
    $region28: #{rnn_forward_sequence.1} parent=1 // pred_region
      %78 = dma.done [#allocation5], 16
    $region29: #{rnn_forward_sequence.1} parent=1 // pred_fallthru
      _
    // Predicated region
    $region30: #{rnn_forward_sequence.1} parent=1 // pred_check
      _
    $region31: #{rnn_forward_sequence.1} parent=1 // pred_check_branch
      %80 = sbr.rel (0) target = $region33
    $region32: #{rnn_forward_sequence.1} parent=1 // pred_region
      %81 = dma.done [#allocation4], 2048
    $region33: #{rnn_forward_sequence.1} parent=1 // pred_fallthru
      _
    // Predicated region
    $region34: #{rnn_forward_sequence.1} parent=1 // pred_check
      _
    $region35: #{rnn_forward_sequence.1} parent=1 // pred_check_branch
      %83 = sbr.rel (0) target = $region37
    $region36: #{rnn_forward_sequence.1} parent=1 // pred_region
      %84 = dma.done [#allocation8], 2048
    $region37: #{rnn_forward_sequence.1} parent=1 // pred_fallthru
      _
    // Predicated region
    $region38: #{rnn_forward_sequence.1} parent=1 // pred_check
      _
    $region39: #{rnn_forward_sequence.1} parent=1 // pred_check_branch
      %86 = sbr.rel (0) target = $region41
    $region40: #{rnn_forward_sequence.1} parent=1 // pred_region
      %87 = dma.done [#allocation8], 2048
    $region41: #{rnn_forward_sequence.1} parent=1 // pred_fallthru
      _
    // Predicated region
    $region42: #{rnn_forward_sequence.1} parent=1 // pred_check
      _
    $region43: #{rnn_forward_sequence.1} parent=1 // pred_check_branch
      %89 = sbr.rel (0) target = $region45
    $region44: #{rnn_forward_sequence.1} parent=1 // pred_region
      %90 = dma.done [#allocation11], 2048
    $region45: #{rnn_forward_sequence.1} parent=1 // pred_fallthru
      _
    %91 = sfence
    %s92 = sld [smem:[#allocation2]]
    %v93 = vld [vmem:[#allocation9] sm:$0xff]
    %v94 = vld [vmem:[#allocation9 + $0x8] sm:$0xff]
    %v95 = vld [vmem:[#allocation9 + $0x10] sm:$0xff]
    %v96 = vld [vmem:[#allocation9 + $0x18] sm:$0xff]
    %v97 = vld [vmem:[#allocation9 + $0x20] sm:$0xff]
    %v98 = vld [vmem:[#allocation9 + $0x28] sm:$0xff]
    %v99 = vld [vmem:[#allocation9 + $0x30] sm:$0xff]
    %v100 = vld [vmem:[#allocation9 + $0x38] sm:$0xff]
    %v101 = vld [vmem:[#allocation9 + $0x40] sm:$0xff]
    %v102 = vld [vmem:[#allocation9 + $0x48] sm:$0xff]
    %v103 = vld [vmem:[#allocation9 + $0x50] sm:$0xff]
    %v104 = vld [vmem:[#allocation9 + $0x58] sm:$0xff]
    %v105 = vld [vmem:[#allocation9 + $0x60] sm:$0xff]
    %v106 = vld [vmem:[#allocation9 + $0x68] sm:$0xff]
    %v107 = vld [vmem:[#allocation9 + $0x70] sm:$0xff]
    %v108 = vld [vmem:[#allocation9 + $0x78] sm:$0xff]
    %s109 = ssub.s32 %s92, 1
    // While loop
    $region46: #{rnn_forward_sequence.1} parent=1 // loop_pre_header
      _
    $region47: #{rnn_forward_sequence.1} parent=1 // loop_header
      %s111 = sphi 0, %s113
      %p112 = scmp.ge.s32.totalorder %s111, %s109
      %v116 = vphi 0.0, %v190
    $region48: #{rnn_forward_sequence.1} parent=1 // loop_header_branch
      %115 = sbr.rel (%p112) target = $region52
    $region49: #{rnn_forward_sequence.1} parent=1 // loop_body
      %s117 = sld [smem:[#allocation3 + %s111]]
      %s118 = scalar_lea.vmem [#allocation6], %s117
      %v119 = vld [vmem:[%s118] sm:$0x1]
      %120 = vmatprep.subr.mxu0 0.0
      %121 = vmatpush1.msra.mxu0 %v108
      %122 = vmatprep.subr.mxu0 0.0
      %123 = vmatpush1.msra.mxu0 %v107
      %124 = vmatprep.subr.mxu0 0.0
      %125 = vmatpush1.msra.mxu0 %v106
      %126 = vmatprep.subr.mxu0 0.0
      %127 = vmatpush1.msra.mxu0 %v105
      %128 = vmatprep.subr.mxu0 0.0
      %129 = vmatpush1.msra.mxu0 %v104
      %130 = vmatprep.subr.mxu0 0.0
      %131 = vmatpush1.msra.mxu0 %v103
      %132 = vmatprep.subr.mxu0 0.0
      %133 = vmatpush1.msra.mxu0 %v102
      %134 = vmatprep.subr.mxu0 0.0
      %135 = vmatpush1.msra.mxu0 %v101
      %136 = vmatprep.subr.mxu0 0.0
      %137 = vmatpush1.msra.mxu0 %v100
      %138 = vmatprep.subr.mxu0 0.0
      %139 = vmatpush1.msra.mxu0 %v99
      %140 = vmatprep.subr.mxu0 0.0
      %141 = vmatpush1.msra.mxu0 %v98
      %142 = vmatprep.subr.mxu0 0.0
      %143 = vmatpush1.msra.mxu0 %v97
      %144 = vmatprep.subr.mxu0 0.0
      %145 = vmatpush1.msra.mxu0 %v96
      %146 = vmatprep.subr.mxu0 0.0
      %147 = vmatpush1.msra.mxu0 %v95
      %148 = vmatprep.subr.mxu0 0.0
      %149 = vmatpush1.msra.mxu0 %v94
      %150 = vmatprep.subr.mxu0 0.0
      %151 = vmatpush1.msra.mxu0 %v93
      %152 = vmatprep.subr.mxu0 0.0
      %153 = vmatpush2.msra.mxu0 0.0
      %154 = vmatprep.subr.mxu0 0.0
      %155 = vmatpush2.msra.mxu0 0.0
      %156 = vmatprep.subr.mxu0 0.0
      %157 = vmatpush2.msra.mxu0 0.0
      %158 = vmatprep.subr.mxu0 0.0
      %159 = vmatpush2.msra.mxu0 0.0
      %160 = vmatprep.subr.mxu0 0.0
      %161 = vmatpush2.msra.mxu0 0.0
      %162 = vmatprep.subr.mxu0 0.0
      %163 = vmatpush2.msra.mxu0 0.0
      %164 = vmatprep.subr.mxu0 0.0
      %165 = vmatpush2.msra.mxu0 0.0
      %166 = vmatprep.subr.mxu0 0.0
      %167 = vmatpush2.msra.mxu0 0.0
      %168 = vmatprep.subr.mxu0 0.0
      %169 = vmatpush2.msra.mxu0 0.0
      %170 = vmatprep.subr.mxu0 0.0
      %171 = vmatpush2.msra.mxu0 0.0
      %172 = vmatprep.subr.mxu0 0.0
      %173 = vmatpush2.msra.mxu0 0.0
      %174 = vmatprep.subr.mxu0 0.0
      %175 = vmatpush2.msra.mxu0 0.0
      %176 = vmatprep.subr.mxu0 0.0
      %177 = vmatpush2.msra.mxu0 0.0
      %178 = vmatprep.subr.mxu0 0.0
      %179 = vmatpush2.msra.mxu0 0.0
      %180 = vmatprep.subr.mxu0 0.0
      %181 = vmatpush2.msra.mxu0 0.0
      %182 = vmatprep.subr.mxu0 0.0
      %183 = vmatpush2.msra.mxu0 0.0
      %184 = vmatprep.mubr.f32.mxu0 0.0
      %185 = vmatmul.mubr.f32.gmra.mxu0 %v116
      %v186 = vpop.f32.mrf.mxu0
      %v187 = vadd.f32 0.0, %v186
      %v188 = vpop.f32.mrf.mxu0
      %189 = vdwg.mxu0
      %v190 = vadd.f32 %v119, %v187
    $region50: #{rnn_forward_sequence.1} parent=1 // loop_footer
      %s113 = sadd.s32 %s111, 1
    $region51: #{rnn_forward_sequence.1} parent=1 // loop_footer_branch
      %110 = sbr.rel target = $region47
    $region52: #{rnn_forward_sequence.1} parent=1 // loop_exit
      _
    %s191 = sld [smem:[#allocation3 + %s109]]
    %s192 = scalar_lea.vmem [#allocation6], %s191
    %v193 = vld [vmem:[%s192] sm:$0x1]
    %194 = vmatprep.subr.mxu0 0.0
    %195 = vmatpush1.msra.mxu0 %v108
    %196 = vmatprep.subr.mxu0 0.0
    %197 = vmatpush1.msra.mxu0 %v107
    %198 = vmatprep.subr.mxu0 0.0
    %199 = vmatpush1.msra.mxu0 %v106
    %200 = vmatprep.subr.mxu0 0.0
    %201 = vmatpush1.msra.mxu0 %v105
    %202 = vmatprep.subr.mxu0 0.0
    %203 = vmatpush1.msra.mxu0 %v104
    %204 = vmatprep.subr.mxu0 0.0
    %205 = vmatpush1.msra.mxu0 %v103
    %206 = vmatprep.subr.mxu0 0.0
    %207 = vmatpush1.msra.mxu0 %v102
    %208 = vmatprep.subr.mxu0 0.0
    %209 = vmatpush1.msra.mxu0 %v101
    %210 = vmatprep.subr.mxu0 0.0
    %211 = vmatpush1.msra.mxu0 %v100
    %212 = vmatprep.subr.mxu0 0.0
    %213 = vmatpush1.msra.mxu0 %v99
    %214 = vmatprep.subr.mxu0 0.0
    %215 = vmatpush1.msra.mxu0 %v98
    %216 = vmatprep.subr.mxu0 0.0
    %217 = vmatpush1.msra.mxu0 %v97
    %218 = vmatprep.subr.mxu0 0.0
    %219 = vmatpush1.msra.mxu0 %v96
    %220 = vmatprep.subr.mxu0 0.0
    %221 = vmatpush1.msra.mxu0 %v95
    %222 = vmatprep.subr.mxu0 0.0
    %223 = vmatpush1.msra.mxu0 %v94
    %224 = vmatprep.subr.mxu0 0.0
    %225 = vmatpush1.msra.mxu0 %v93
    %226 = vmatprep.subr.mxu0 0.0
    %227 = vmatpush2.msra.mxu0 0.0
    %228 = vmatprep.subr.mxu0 0.0
    %229 = vmatpush2.msra.mxu0 0.0
    %230 = vmatprep.subr.mxu0 0.0
    %231 = vmatpush2.msra.mxu0 0.0
    %232 = vmatprep.subr.mxu0 0.0
    %233 = vmatpush2.msra.mxu0 0.0
    %234 = vmatprep.subr.mxu0 0.0
    %235 = vmatpush2.msra.mxu0 0.0
    %236 = vmatprep.subr.mxu0 0.0
    %237 = vmatpush2.msra.mxu0 0.0
    %238 = vmatprep.subr.mxu0 0.0
    %239 = vmatpush2.msra.mxu0 0.0
    %240 = vmatprep.subr.mxu0 0.0
    %241 = vmatpush2.msra.mxu0 0.0
    %242 = vmatprep.subr.mxu0 0.0
    %243 = vmatpush2.msra.mxu0 0.0
    %244 = vmatprep.subr.mxu0 0.0
    %245 = vmatpush2.msra.mxu0 0.0
    %246 = vmatprep.subr.mxu0 0.0
    %247 = vmatpush2.msra.mxu0 0.0
    %248 = vmatprep.subr.mxu0 0.0
    %249 = vmatpush2.msra.mxu0 0.0
    %250 = vmatprep.subr.mxu0 0.0
    %251 = vmatpush2.msra.mxu0 0.0
    %252 = vmatprep.subr.mxu0 0.0
    %253 = vmatpush2.msra.mxu0 0.0
    %254 = vmatprep.subr.mxu0 0.0
    %255 = vmatpush2.msra.mxu0 0.0
    %256 = vmatprep.subr.mxu0 0.0
    %257 = vmatpush2.msra.mxu0 0.0
    %258 = vmatprep.mubr.f32.mxu0 0.0
    %259 = vmatmul.mubr.f32.gmra.mxu0 %v116
    %v260 = vpop.f32.mrf.mxu0
    %v261 = vadd.f32 0.0, %v260
    %v262 = vpop.f32.mrf.mxu0
    %263 = vdwg.mxu0
    %v264 = vadd.f32 %v193, %v261
    %s265 = scalar_lea.vmem [#allocation7], %s191
    %v266 = vld [vmem:[%s265] sm:$0x1]
    %v267 = vld [vmem:[#allocation10] sm:$0xff]
    %v268 = vld [vmem:[#allocation10 + $0x8] sm:$0xff]
    %v269 = vld [vmem:[#allocation10 + $0x10] sm:$0xff]
    %v270 = vld [vmem:[#allocation10 + $0x18] sm:$0xff]
    %v271 = vld [vmem:[#allocation10 + $0x20] sm:$0xff]
    %v272 = vld [vmem:[#allocation10 + $0x28] sm:$0xff]
    %v273 = vld [vmem:[#allocation10 + $0x30] sm:$0xff]
    %v274 = vld [vmem:[#allocation10 + $0x38] sm:$0xff]
    %v275 = vld [vmem:[#allocation10 + $0x40] sm:$0xff]
    %v276 = vld [vmem:[#allocation10 + $0x48] sm:$0xff]
    %v277 = vld [vmem:[#allocation10 + $0x50] sm:$0xff]
    %v278 = vld [vmem:[#allocation10 + $0x58] sm:$0xff]
    %v279 = vld [vmem:[#allocation10 + $0x60] sm:$0xff]
    %v280 = vld [vmem:[#allocation10 + $0x68] sm:$0xff]
    %v281 = vld [vmem:[#allocation10 + $0x70] sm:$0xff]
    %v282 = vld [vmem:[#allocation10 + $0x78] sm:$0xff]
    %283 = vmatprep.subr.mxu0 0.0
    %284 = vmatpush1.msra.mxu0 %v282
    %285 = vmatprep.subr.mxu0 0.0
    %286 = vmatpush1.msra.mxu0 %v281
    %287 = vmatprep.subr.mxu0 0.0
    %288 = vmatpush1.msra.mxu0 %v280
    %289 = vmatprep.subr.mxu0 0.0
    %290 = vmatpush1.msra.mxu0 %v279
    %291 = vmatprep.subr.mxu0 0.0
    %292 = vmatpush1.msra.mxu0 %v278
    %293 = vmatprep.subr.mxu0 0.0
    %294 = vmatpush1.msra.mxu0 %v277
    %295 = vmatprep.subr.mxu0 0.0
    %296 = vmatpush1.msra.mxu0 %v276
    %297 = vmatprep.subr.mxu0 0.0
    %298 = vmatpush1.msra.mxu0 %v275
    %299 = vmatprep.subr.mxu0 0.0
    %300 = vmatpush1.msra.mxu0 %v274
    %301 = vmatprep.subr.mxu0 0.0
    %302 = vmatpush1.msra.mxu0 %v273
    %303 = vmatprep.subr.mxu0 0.0
    %304 = vmatpush1.msra.mxu0 %v272
    %305 = vmatprep.subr.mxu0 0.0
    %306 = vmatpush1.msra.mxu0 %v271
    %307 = vmatprep.subr.mxu0 0.0
    %308 = vmatpush1.msra.mxu0 %v270
    %309 = vmatprep.subr.mxu0 0.0
    %310 = vmatpush1.msra.mxu0 %v269
    %311 = vmatprep.subr.mxu0 0.0
    %312 = vmatpush1.msra.mxu0 %v268
    %313 = vmatprep.subr.mxu0 0.0
    %314 = vmatpush1.msra.mxu0 %v267
    %315 = vmatprep.subr.mxu0 0.0
    %316 = vmatpush2.msra.mxu0 0.0
    %317 = vmatprep.subr.mxu0 0.0
    %318 = vmatpush2.msra.mxu0 0.0
    %319 = vmatprep.subr.mxu0 0.0
    %320 = vmatpush2.msra.mxu0 0.0
    %321 = vmatprep.subr.mxu0 0.0
    %322 = vmatpush2.msra.mxu0 0.0
    %323 = vmatprep.subr.mxu0 0.0
    %324 = vmatpush2.msra.mxu0 0.0
    %325 = vmatprep.subr.mxu0 0.0
    %326 = vmatpush2.msra.mxu0 0.0
    %327 = vmatprep.subr.mxu0 0.0
    %328 = vmatpush2.msra.mxu0 0.0
    %329 = vmatprep.subr.mxu0 0.0
    %330 = vmatpush2.msra.mxu0 0.0
    %331 = vmatprep.subr.mxu0 0.0
    %332 = vmatpush2.msra.mxu0 0.0
    %333 = vmatprep.subr.mxu0 0.0
    %334 = vmatpush2.msra.mxu0 0.0
    %335 = vmatprep.subr.mxu0 0.0
    %336 = vmatpush2.msra.mxu0 0.0
    %337 = vmatprep.subr.mxu0 0.0
    %338 = vmatpush2.msra.mxu0 0.0
    %339 = vmatprep.subr.mxu0 0.0
    %340 = vmatpush2.msra.mxu0 0.0
    %341 = vmatprep.subr.mxu0 0.0
    %342 = vmatpush2.msra.mxu0 0.0
    %343 = vmatprep.subr.mxu0 0.0
    %344 = vmatpush2.msra.mxu0 0.0
    %345 = vmatprep.subr.mxu0 0.0
    %346 = vmatpush2.msra.mxu0 0.0
    %347 = vmatprep.mubr.f32.mxu0 0.0
    %348 = vmatmul.mubr.f32.gmra.mxu0 %v116
    %v349 = vpop.f32.mrf.mxu0
    %v350 = vadd.f32 0.0, %v349
    %v351 = vpop.f32.mrf.mxu0
    %352 = vdwg.mxu0
    %v353 = vadd.f32 %v266, %v350
    %v354 = vlaneseq
    %v355 = vand.u32 %v354, 127
    %vm356 = vcmp.lt.s32.totalorder %v355, 18
    %v357 = vsel %vm356, %v353, -1e+30
    %vm358 = vcmask 1040384
    %v359 = vsel %vm358, %v357, -inf
    %360 = vmax.xlane.f32.xlu0 %v359
    %v361 = vpop.xlane.xlu0 %360
    %v362 = vsub.f32 %v357, %v361
    %v363 = vmul.f32 %v362, 1.442695
    %v364 = vpow.pop %v363
    %v365 = vsel %vm358, %v364, 0.0
    %366 = vadd.xlane.f32.xlu0 %v365
    %v367 = vpop.xlane.xlu0 %366
    %v368 = vlog2.pop %v367
    %v369 = vmul.f32 %v368, 0.6931472
    %v370 = vsub.f32 %v362, %v369
    %v372 = vrot.slane %v264, 7
    %v374 = vsel %vm358, %v370, %v372
    %vm375 = vcmask 1041408
    %v376 = vsel %vm375, %v374, 0.0
    %377 = vst [vmem:[%s6] sm:$0xff] %v376
    // Predicated region
    $region53: #{rnn_forward_sequence.1} parent=1 // pred_check
      _
    $region54: #{rnn_forward_sequence.1} parent=1 // pred_check_branch
      %379 = sbr.rel (0) target = $region56
    $region55: #{rnn_forward_sequence.1} parent=1 // pred_region
      _
    $region56: #{rnn_forward_sequence.1} parent=1 // pred_fallthru
      _
    // Predicated region
    $region57: #{rnn_forward_sequence.1} parent=1 // pred_check
      _
    $region58: #{rnn_forward_sequence.1} parent=1 // pred_check_branch
      %381 = sbr.rel (0) target = $region60
    $region59: #{rnn_forward_sequence.1} parent=1 // pred_region
      _
    $region60: #{rnn_forward_sequence.1} parent=1 // pred_fallthru
      _
    %382 = vsyncpa [#allocation4], 1
    %383 = vsyncpa [#allocation8], 1
    %384 = vsyncpa [#allocation11], 1
    %385 = vsyncpa [#allocation5], 1

</llo_original>
